<compile_context>
chip_gen: v5e
topology: v5e:2x2
jax: 0.10.0
libtpu: 0.0.40
codegen_flags: <defaults>
</compile_context>

<pallas_src>
import functools

import jax
import jax.numpy as jnp
from jax.experimental import pallas as pl
from jax.experimental.pallas import tpu as pltpu

_LANE = 128
_SUBLANE = 8


def _round_up(n, m):
    return ((n + m - 1) // m) * m


# --------------------------------------------------------------------------
# Host-side packing: fuse actor+critic params into one lane-dense f32 slab.
# --------------------------------------------------------------------------
def pack_params(params, input_dim, hidden_dim, output_dim):
    """Pack all weights/biases into ONE (rows, LANES) f32 slab.

    Fused block-diagonal layout (actor block = cols [0:H), critic = [H:2H)):
      layer1: [aw1 | cw1]                 (input_dim, 2H)
      layer2: blockdiag(aw2, cw2)         (2H, 2H)
      layer3: [[aw3, 0], [0, cw3]]        (2H, output_dim+1)
    Everything is zero-padded to LANES = round_up(max(2H, out+1), 128) columns.

    Row layout (all segment starts 8-aligned):
      [0 : din_pad)                 W1   (rows [0:input_dim) used)
      [din_pad : din_pad+8)         biases: row0=b1, row1=b2, row2=b3
      [din_pad+8 : din_pad+8+L)     W2
      [din_pad+8+L : din_pad+8+2L)  W3
    """
    H = hidden_dim
    lanes = _round_up(max(2 * H, output_dim + 1), _LANE)
    din_pad = _round_up(input_dim, _SUBLANE)
    r_b = din_pad
    r_w2 = din_pad + _SUBLANE
    r_w3 = r_w2 + lanes
    rows = r_w3 + lanes

    slab = jnp.zeros((rows, lanes), jnp.float32)
    # layer 1: [aw1 | cw1]
    slab = slab.at[0:input_dim, 0:H].set(params["aw1"])
    slab = slab.at[0:input_dim, H:2 * H].set(params["cw1"])
    # biases (one row each, actor block then critic block)
    slab = slab.at[r_b, 0:H].set(params["ab1"][0])
    slab = slab.at[r_b, H:2 * H].set(params["cb1"][0])
    slab = slab.at[r_b + 1, 0:H].set(params["ab2"][0])
    slab = slab.at[r_b + 1, H:2 * H].set(params["cb2"][0])
    slab = slab.at[r_b + 2, 0:output_dim].set(params["ab3"][0])
    slab = slab.at[r_b + 2, output_dim:output_dim + 1].set(params["cb3"][0])
    # layer 2: blockdiag(aw2, cw2)
    slab = slab.at[r_w2:r_w2 + H, 0:H].set(params["aw2"])
    slab = slab.at[r_w2 + H:r_w2 + 2 * H, H:2 * H].set(params["cw2"])
    # layer 3: [[aw3, 0], [0, cw3]]
    slab = slab.at[r_w3:r_w3 + H, 0:output_dim].set(params["aw3"])
    slab = slab.at[r_w3 + H:r_w3 + 2 * H, output_dim:output_dim + 1].set(
        params["cw3"])
    return slab


# --------------------------------------------------------------------------
# Kernel: 3 fused matmuls (actor || critic) on lane-dense operands.
# --------------------------------------------------------------------------
def _make_kernel(input_dim, lanes, din_pad):
    r_b = din_pad
    r_w2 = din_pad + _SUBLANE
    r_w3 = r_w2 + lanes

    def kernel(x_ref, p_ref, o_ref):
        x = x_ref[...].astype(jnp.float32)
        # static slices into the single packed param slab (no extra DMAs)
        w1 = p_ref[0:input_dim, :]
        b1 = p_ref[r_b:r_b + 1, :]
        b2 = p_ref[r_b + 1:r_b + 2, :]
        b3 = p_ref[r_b + 2:r_b + 3, :]
        w2 = p_ref[r_w2:r_w2 + lanes, :]
        w3 = p_ref[r_w3:r_w3 + lanes, :]

        h = jnp.tanh(jnp.dot(x, w1, preferred_element_type=jnp.float32) + b1)
        h = jnp.tanh(jnp.dot(h, w2, preferred_element_type=jnp.float32) + b2)
        out = jnp.dot(h, w3, preferred_element_type=jnp.float32) + b3
        o_ref[...] = out.astype(o_ref.dtype)  # single unmasked (B, 128) store

    return kernel


@functools.partial(
    jax.jit, static_argnames=("input_dim", "hidden_dim", "output_dim"))
def svpg_particle_forward(x, slab, logstd, *, input_dim, hidden_dim, output_dim):
    """Returns (mean, std, value); (mean, std) parameterize the Normal dist."""
    B = x.shape[0]
    lanes = slab.shape[1]
    din_pad = _round_up(input_dim, _SUBLANE)

    vmem = pl.BlockSpec(memory_space=pltpu.MemorySpace.VMEM)
    out = pl.pallas_call(
        _make_kernel(input_dim, lanes, din_pad),
        out_shape=jax.ShapeDtypeStruct((B, lanes), jnp.float32),
        in_specs=[vmem, vmem],
        out_specs=vmem,
    )(x, slab)

    mean = out[:, :output_dim]
    value = out[:, output_dim:output_dim + 1]
    # std does not depend on x: computed/broadcast outside the kernel
    std = jnp.broadcast_to(jnp.exp(logstd) + 1e-6, (B, output_dim))
    return mean, std, value


# --------------------------------------------------------------------------
# Param init (PyTorch nn.Linear-style) and pure-JAX reference.
# --------------------------------------------------------------------------
def init_params(key, input_dim, hidden_dim, output_dim):
    def linear(k, fan_in, fan_out):
        kw, kb = jax.random.split(k)
        bound = 1.0 / jnp.sqrt(fan_in)
        w = jax.random.uniform(kw, (fan_in, fan_out), jnp.float32, -bound, bound)
        b = jax.random.uniform(kb, (1, fan_out), jnp.float32, -bound, bound)
        return w, b

    keys = jax.random.split(key, 6)
    aw1, ab1 = linear(keys[0], input_dim, hidden_dim)
    aw2, ab2 = linear(keys[1], hidden_dim, hidden_dim)
    aw3, ab3 = linear(keys[2], hidden_dim, output_dim)
    cw1, cb1 = linear(keys[3], input_dim, hidden_dim)
    cw2, cb2 = linear(keys[4], hidden_dim, hidden_dim)
    cw3, cb3 = linear(keys[5], hidden_dim, 1)
    logstd = jnp.zeros((1, output_dim), jnp.float32) - 1.0  # nn.Parameter(zeros - 1)
    return dict(
        aw1=aw1, ab1=ab1, aw2=aw2, ab2=ab2, aw3=aw3, ab3=ab3, logstd=logstd,
        cw1=cw1, cb1=cb1, cw2=cw2, cb2=cb2, cw3=cw3, cb3=cb3,
    )


def _reference_forward(x, p):
    h = jnp.tanh(x @ p["aw1"] + p["ab1"])
    h = jnp.tanh(h @ p["aw2"] + p["ab2"])
    mean = h @ p["aw3"] + p["ab3"]
    std = jnp.broadcast_to(jnp.exp(p["logstd"]) + 1e-6, mean.shape)
    hc = jnp.tanh(x @ p["cw1"] + p["cb1"])
    hc = jnp.tanh(hc @ p["cw2"] + p["cb2"])
    value = hc @ p["cw3"] + p["cb3"]
    return mean, std, value


if __name__ == "__main__":
    batch, input_dim, hidden_dim, output_dim = 8, 16, 32, 8

    key = jax.random.PRNGKey(0)
    kx, kp = jax.random.split(key)
    x = jax.random.normal(kx, (batch, input_dim), jnp.float32)
    params = init_params(kp, input_dim, hidden_dim, output_dim)

    # one-time packing of all actor+critic params into a single slab
    slab = jax.block_until_ready(
        pack_params(params, input_dim, hidden_dim, output_dim))

    mean, std, value = svpg_particle_forward(
        x, slab, params["logstd"],
        input_dim=input_dim, hidden_dim=hidden_dim, output_dim=output_dim)
    jax.block_until_ready((mean, std, value))

    # correctness check against pure-JAX reference
    ref_mean, ref_std, ref_value = _reference_forward(x, params)
    assert jnp.allclose(mean, ref_mean, atol=1e-5, rtol=1e-5)
    assert jnp.allclose(std, ref_std, atol=1e-6, rtol=1e-6)
    assert jnp.allclose(value, ref_value, atol=1e-5, rtol=1e-5)
    assert mean.shape == (batch, output_dim)
    assert std.shape == (batch, output_dim)
    assert value.shape == (batch, 1)

    # TODO(synk): torch.distributions.Normal is represented as the (mean, std)
    # pair; sampling/log_prob are left to the caller.
    print("KERNEL_OK")
</pallas_src>

<mosaic_0001>
module attributes {stable_mosaic.version = 11 : i64} {
  func.func @kernel(%arg0: memref<8x16xf32, #tpu.memory_space<vmem>>, %arg1: memref<280x128xf32, #tpu.memory_space<vmem>>, %arg2: memref<8x128xf32, #tpu.memory_space<vmem>>) attributes {dimension_semantics = [], scalar_prefetch = 0 : i64, scratch_operands = 0 : i64, tpu.core_type = #tpu.core_type<tc>} {
    %c0 = arith.constant 0 : index
    %c0_0 = arith.constant 0 : index
    %0 = vector.load %arg0[%c0, %c0_0] : memref<8x16xf32, #tpu.memory_space<vmem>>, vector<8x16xf32>
    %c0_1 = arith.constant 0 : index
    %c0_2 = arith.constant 0 : index
    %1 = vector.load %arg1[%c0_1, %c0_2] : memref<280x128xf32, #tpu.memory_space<vmem>>, vector<16x128xf32>
    %c16 = arith.constant 16 : index
    %c0_3 = arith.constant 0 : index
    %2 = vector.load %arg1[%c16, %c0_3] : memref<280x128xf32, #tpu.memory_space<vmem>>, vector<1x128xf32>
    %c17 = arith.constant 17 : index
    %c0_4 = arith.constant 0 : index
    %3 = vector.load %arg1[%c17, %c0_4] : memref<280x128xf32, #tpu.memory_space<vmem>>, vector<1x128xf32>
    %c18 = arith.constant 18 : index
    %c0_5 = arith.constant 0 : index
    %4 = vector.load %arg1[%c18, %c0_5] : memref<280x128xf32, #tpu.memory_space<vmem>>, vector<1x128xf32>
    %c24 = arith.constant 24 : index
    %c0_6 = arith.constant 0 : index
    %5 = vector.load %arg1[%c24, %c0_6] : memref<280x128xf32, #tpu.memory_space<vmem>>, vector<128x128xf32>
    %c152 = arith.constant 152 : index
    %c0_7 = arith.constant 0 : index
    %6 = vector.load %arg1[%c152, %c0_7] : memref<280x128xf32, #tpu.memory_space<vmem>>, vector<128x128xf32>
    %cst = arith.constant dense<0.000000e+00> : vector<8x128xf32>
    %7 = tpu.matmul %0, %1, %cst {dimension_numbers = #tpu.dot_dimension_numbers<[1], [0], [0], [1], [0, 0, 1, 1], [], []>} : vector<8x16xf32>, vector<16x128xf32>, vector<8x128xf32> -> vector<8x128xf32>
    %8 = vector.broadcast %2 : vector<1x128xf32> to vector<8x128xf32>
    %9 = arith.addf %7, %8 : vector<8x128xf32>
    %10 = math.tanh %9 : vector<8x128xf32>
    %cst_8 = arith.constant dense<0.000000e+00> : vector<8x128xf32>
    %11 = tpu.matmul %10, %5, %cst_8 {dimension_numbers = #tpu.dot_dimension_numbers<[1], [0], [0], [1], [0, 0, 1, 1], [], []>} : vector<8x128xf32>, vector<128x128xf32>, vector<8x128xf32> -> vector<8x128xf32>
    %12 = vector.broadcast %3 : vector<1x128xf32> to vector<8x128xf32>
    %13 = arith.addf %11, %12 : vector<8x128xf32>
    %14 = math.tanh %13 : vector<8x128xf32>
    %cst_9 = arith.constant dense<0.000000e+00> : vector<8x128xf32>
    %15 = tpu.matmul %14, %6, %cst_9 {dimension_numbers = #tpu.dot_dimension_numbers<[1], [0], [0], [1], [0, 0, 1, 1], [], []>} : vector<8x128xf32>, vector<128x128xf32>, vector<8x128xf32> -> vector<8x128xf32>
    %16 = vector.broadcast %4 : vector<1x128xf32> to vector<8x128xf32>
    %17 = arith.addf %15, %16 : vector<8x128xf32>
    %c0_10 = arith.constant 0 : index
    %c0_11 = arith.constant 0 : index
    %18 = vector.load %arg2[%c0_10, %c0_11] : memref<8x128xf32, #tpu.memory_space<vmem>>, vector<8x128xf32>
    tpu.vector_store %arg2[%c0_10, %c0_11], %17 {strides = array<i32>} : memref<8x128xf32, #tpu.memory_space<vmem>>, vector<8x128xf32>,
    return
  }
}

</mosaic_0001>

<llo_original>
// kernel: svpg_particle_forward.1
$region0: #{svpg_particle_forward.1}
  #allocation0 [shape = 'u32[]', space=smem, size = 0x4, offset = 0x4, fixed_abs, tag = 'smem constant byte address 0x4 - core index']
  #allocation1 [shape = 'u32[72,128]{1,0:T(1,128)}', space=vmem, size = 0x9000, scoped, tag = 'internal scratch']
  %s0 = inlined_call_operand.hbm [shape: f32[8,16], index: 0, kind: input, shape index: {}]
  %s1 = inlined_call_operand.hbm [shape: f32[280,128], index: 1, kind: input, shape index: {}]
  %s2 = inlined_call_operand.vmem [shape: f32[8,128], index: 2, kind: output, shape index: {}]
  %s3 = sld [smem:[#allocation0]]
  $region26: #{svpg_particle_forward.1} parent=0
    _
  %s5 = ssub.s32 1, %s3
  %s6 = scalar_select 0, %s5, %s3
  $region1: #{svpg_particle_forward.1} parent=0
    #allocation2 [shape = 'u8[4096]{0}', space=vmem, size = 0x1000, scoped, tag = 'input window, operand 0, single buffered']
    #allocation3 [shape = 's32[1]{0}', space=sflag, size = 0x4, scoped, tag = 'scoped memory for svpg_particle_forward.1']
    #allocation4 [shape = 'u8[143360]{0}', space=vmem, size = 0x23000, scoped, tag = 'input window, operand 1, single buffered']
    #allocation5 [shape = 's32[1]{0}', space=sflag, size = 0x4, scoped, tag = 'scoped memory for svpg_particle_forward.1']
    %7 = vsyncpa [#allocation3], 0
    %8 = vsyncpa [#allocation5], 0
    // Predicated region
    $region2: #{svpg_particle_forward.1} parent=1 // pred_check
      _
    $region3: #{svpg_particle_forward.1} parent=1 // pred_check_branch
      %10 = sbr.rel (0) target = $region5
    $region4: #{svpg_particle_forward.1} parent=1 // pred_region
      %12 = vsyncadd [#allocation3], 0
      %s14 = sshll.u32 %s0, 4
      %s15 = int_to_ptr.hbm [resolvable:$true] %s14
      %s16 = sshll.u32 [#allocation2], 4
      %s17 = int_to_ptr.vmem [resolvable:$true] %s16
      %19 = dma.hbm_to_vmem [thread:$0]  %s15, 128, %s17, [#allocation3]
    $region5: #{svpg_particle_forward.1} parent=1 // pred_fallthru
      _
    // Predicated region
    $region6: #{svpg_particle_forward.1} parent=1 // pred_check
      _
    $region7: #{svpg_particle_forward.1} parent=1 // pred_check_branch
      %21 = sbr.rel (0) target = $region9
    $region8: #{svpg_particle_forward.1} parent=1 // pred_region
      %23 = vsyncadd [#allocation5], 0
      %s24 = sshll.u32 %s1, 4
      %s25 = int_to_ptr.hbm [resolvable:$true] %s24
      %s26 = sshll.u32 [#allocation4], 4
      %s27 = int_to_ptr.vmem [resolvable:$true] %s26
      %32 = dma.hbm_to_vmem [thread:$0]  %s25, 4480, %s27, [#allocation5], 128, 128, 8
    $region9: #{svpg_particle_forward.1} parent=1 // pred_fallthru
      _
    // Predicated region
    $region10: #{svpg_particle_forward.1} parent=1 // pred_check
      _
    $region11: #{svpg_particle_forward.1} parent=1 // pred_check_branch
      %34 = sbr.rel (0) target = $region13
    $region12: #{svpg_particle_forward.1} parent=1 // pred_region
      %36 = dma.done [#allocation3], 128
    $region13: #{svpg_particle_forward.1} parent=1 // pred_fallthru
      _
    // Predicated region
    $region14: #{svpg_particle_forward.1} parent=1 // pred_check
      _
    $region15: #{svpg_particle_forward.1} parent=1 // pred_check_branch
      %38 = sbr.rel (0) target = $region17
    $region16: #{svpg_particle_forward.1} parent=1 // pred_region
      %40 = dma.done [#allocation5], 4480
    $region17: #{svpg_particle_forward.1} parent=1 // pred_fallthru
      _
    %v41 = vld [vmem:[#allocation2] sm:$0xff]
    %v42 = vld [vmem:[#allocation4] sm:$0xff]
    %v43 = vld [vmem:[#allocation4 + $0x8] sm:$0xff]
    %v44 = vld [vmem:[#allocation4 + $0x10] sm:$0x1]
    %v45 = vld [vmem:[#allocation4 + $0x11] sm:$0x1]
    %v46 = vld [vmem:[#allocation4 + $0x12] sm:$0x1]
    %v47 = vld [vmem:[#allocation4 + $0x18] sm:$0xff]
    %v48 = vld [vmem:[#allocation4 + $0x20] sm:$0xff]
    %v49 = vld [vmem:[#allocation4 + $0x28] sm:$0xff]
    %v50 = vld [vmem:[#allocation4 + $0x30] sm:$0xff]
    %v51 = vld [vmem:[#allocation4 + $0x38] sm:$0xff]
    %v52 = vld [vmem:[#allocation4 + $0x40] sm:$0xff]
    %v53 = vld [vmem:[#allocation4 + $0x48] sm:$0xff]
    %v54 = vld [vmem:[#allocation4 + $0x50] sm:$0xff]
    %v55 = vld [vmem:[#allocation4 + $0x58] sm:$0xff]
    %v56 = vld [vmem:[#allocation4 + $0x60] sm:$0xff]
    %v57 = vld [vmem:[#allocation4 + $0x68] sm:$0xff]
    %v58 = vld [vmem:[#allocation4 + $0x70] sm:$0xff]
    %v59 = vld [vmem:[#allocation4 + $0x78] sm:$0xff]
    %v60 = vld [vmem:[#allocation4 + $0x80] sm:$0xff]
    %v61 = vld [vmem:[#allocation4 + $0x88] sm:$0xff]
    %v62 = vld [vmem:[#allocation4 + $0x90] sm:$0xff]
    %v63 = vld [vmem:[#allocation4 + $0x98] sm:$0xff]
    %v64 = vld [vmem:[#allocation4 + $0xa0] sm:$0xff]
    %v65 = vld [vmem:[#allocation4 + $0xa8] sm:$0xff]
    %v66 = vld [vmem:[#allocation4 + $0xb0] sm:$0xff]
    %v67 = vld [vmem:[#allocation4 + $0xb8] sm:$0xff]
    %v68 = vld [vmem:[#allocation4 + $0xc0] sm:$0xff]
    %v69 = vld [vmem:[#allocation4 + $0xc8] sm:$0xff]
    %v70 = vld [vmem:[#allocation4 + $0xd0] sm:$0xff]
    %v71 = vld [vmem:[#allocation4 + $0xd8] sm:$0xff]
    %v72 = vld [vmem:[#allocation4 + $0xe0] sm:$0xff]
    %v73 = vld [vmem:[#allocation4 + $0xe8] sm:$0xff]
    %v74 = vld [vmem:[#allocation4 + $0xf0] sm:$0xff]
    %v75 = vld [vmem:[#allocation4 + $0xf8] sm:$0xff]
    %v76 = vld [vmem:[#allocation4 + $0x100] sm:$0xff]
    %v77 = vld [vmem:[#allocation4 + $0x108] sm:$0xff]
    %v78 = vld [vmem:[#allocation4 + $0x110] sm:$0xff]
    %v79 = vperm.slane %v44, 0
    %vm80 = vcmask 130048
    %v82 = vsel %vm80, %v41, 0
    %84 = vmatpush.msra.mxu0 0.0
    %85 = vmatpush.msra.mxu0 0.0
    %86 = vmatpush.msra.mxu0 0.0
    %87 = vmatpush.msra.mxu0 0.0
    %88 = vmatpush.msra.mxu0 0.0
    %89 = vmatpush.msra.mxu0 0.0
    %90 = vmatpush.msra.mxu0 0.0
    %91 = vmatpush.msra.mxu0 0.0
    %92 = vmatpush.msra.mxu0 0.0
    %93 = vmatpush.msra.mxu0 0.0
    %94 = vmatpush.msra.mxu0 0.0
    %95 = vmatpush.msra.mxu0 0.0
    %96 = vmatpush.msra.mxu0 0.0
    %97 = vmatpush.msra.mxu0 0.0
    %98 = vmatpush.msra.mxu0 %v43
    %99 = vmatpush.msra.mxu0 %v42
    %100 = vmatmul.f32.gmra.mxu0 %v82
    %v101 = vpop.f32.mrf.mxu0
    %v102 = vadd.f32 %v79, %v101
    %103 = vdwg.mxu0
    %v104 = vtanh.pop %v102
    %v105 = vperm.slane %v45, 0
    %106 = vmatpush.msra.mxu0 %v62
    %107 = vmatpush.msra.mxu0 %v61
    %108 = vmatpush.msra.mxu0 %v60
    %109 = vmatpush.msra.mxu0 %v59
    %110 = vmatpush.msra.mxu0 %v58
    %111 = vmatpush.msra.mxu0 %v57
    %112 = vmatpush.msra.mxu0 %v56
    %113 = vmatpush.msra.mxu0 %v55
    %114 = vmatpush.msra.mxu0 %v54
    %115 = vmatpush.msra.mxu0 %v53
    %116 = vmatpush.msra.mxu0 %v52
    %117 = vmatpush.msra.mxu0 %v51
    %118 = vmatpush.msra.mxu0 %v50
    %119 = vmatpush.msra.mxu0 %v49
    %120 = vmatpush.msra.mxu0 %v48
    %121 = vmatpush.msra.mxu0 %v47
    %122 = vmatmul.f32.gmra.mxu0 %v104
    %v123 = vpop.f32.mrf.mxu0
    %v124 = vadd.f32 %v105, %v123
    %125 = vdwg.mxu0
    %v126 = vtanh.pop %v124
    %v127 = vperm.slane %v46, 0
    %128 = vmatpush.msra.mxu0 %v78
    %129 = vmatpush.msra.mxu0 %v77
    %130 = vmatpush.msra.mxu0 %v76
    %131 = vmatpush.msra.mxu0 %v75
    %132 = vmatpush.msra.mxu0 %v74
    %133 = vmatpush.msra.mxu0 %v73
    %134 = vmatpush.msra.mxu0 %v72
    %135 = vmatpush.msra.mxu0 %v71
    %136 = vmatpush.msra.mxu0 %v70
    %137 = vmatpush.msra.mxu0 %v69
    %138 = vmatpush.msra.mxu0 %v68
    %139 = vmatpush.msra.mxu0 %v67
    %140 = vmatpush.msra.mxu0 %v66
    %141 = vmatpush.msra.mxu0 %v65
    %142 = vmatpush.msra.mxu0 %v64
    %143 = vmatpush.msra.mxu0 %v63
    %144 = vmatmul.f32.gmra.mxu0 %v126
    %v145 = vpop.f32.mrf.mxu0
    %v146 = vadd.f32 %v127, %v145
    %147 = vdwg.mxu0
    %148 = vst [vmem:[%s2] sm:$0xff] %v146
    // Predicated region
    $region18: #{svpg_particle_forward.1} parent=1 // pred_check
      _
    $region19: #{svpg_particle_forward.1} parent=1 // pred_check_branch
      %150 = sbr.rel (0) target = $region21
    $region20: #{svpg_particle_forward.1} parent=1 // pred_region
      _
    $region21: #{svpg_particle_forward.1} parent=1 // pred_fallthru
      _
    // Predicated region
    $region22: #{svpg_particle_forward.1} parent=1 // pred_check
      _
    $region23: #{svpg_particle_forward.1} parent=1 // pred_check_branch
      %152 = sbr.rel (0) target = $region25
    $region24: #{svpg_particle_forward.1} parent=1 // pred_region
      _
    $region25: #{svpg_particle_forward.1} parent=1 // pred_fallthru
      _
    %153 = vsyncpa [#allocation3], 1
    %154 = vsyncpa [#allocation5], 1

</llo_original>
